<compile_context>
chip_gen: v7x
topology: tpu7x:2x2x1
jax: 0.10.0
libtpu: 0.0.40
codegen_flags: <defaults>
</compile_context>

<pallas_src>
import jax
import jax.numpy as jnp
from jax.experimental import pallas as pl
from jax.experimental.pallas import tpu as pltpu

_LANE = 128
_SUBLANE = 8
_VMEM_LIMIT = 64 << 20       # raise scoped VMEM above 16/32 MiB defaults (<= v7x physical)
_VMEM_BUDGET = 48 << 20      # sizing target, leaves headroom under the limit


def _round_up(x, m):
    return (x + m - 1) // m * m


def _elu(v):
    # ELU(alpha=1): v for v>0, exp(v)-1 otherwise (exp on EUP, select on VPU).
    return jnp.where(v > 0, v, jnp.exp(jnp.minimum(v, 0.0)) - 1.0)


def _make_mlp_kernel(final_linear):
    def kernel(x_ref, w1_ref, b1_ref, w2_ref, b2_ref, *rest):
        if final_linear:
            w3_ref, b3_ref, scale_ref, shift_ref, o_ref = rest
        else:
            scale_ref, shift_ref, o_ref = rest

        x = x_ref[...]
        # fc1 -> ELU  (MXU, f32 accumulation)
        h = jnp.dot(x, w1_ref[...], preferred_element_type=jnp.float32)
        h = _elu(h + b1_ref[...].astype(jnp.float32))
        # TODO(synk): training-mode dropout not implemented (inference => identity).
        # fc2 -> ELU
        h = jnp.dot(h.astype(w2_ref.dtype), w2_ref[...],
                    preferred_element_type=jnp.float32)
        h = _elu(h + b2_ref[...].astype(jnp.float32))
        if final_linear:
            h = jnp.dot(h.astype(w3_ref.dtype), w3_ref[...],
                        preferred_element_type=jnp.float32)
            h = h + b3_ref[...].astype(jnp.float32)
        # eval-mode BatchNorm folded into a per-feature affine (identity if BN off)
        h = h * scale_ref[...] + shift_ref[...]
        o_ref[...] = h.astype(o_ref.dtype)

    return kernel


def fold_batchnorm(gamma, beta, running_mean, running_var, eps=1e-5):
    """Fold eval-mode BatchNorm1d into a per-feature (scale, shift)."""
    scale = gamma / jnp.sqrt(running_var + eps)
    shift = beta - running_mean * scale
    return scale, shift


def mlp_forward(x, w1, b1, w2, b2, *, w3=None, b3=None,
                bn_scale=None, bn_shift=None, tile_m=None):
    """Fused MLP forward (eval-mode semantics).

    x : (..., n_in)    w1 : (n_in, n_hid)    w2 : (n_hid, n_out)
    Optional w3/b3 : fc_final.  bn_scale/bn_shift : folded eval-mode BN
    (pass None for identity / use_batch_norm=False).
    """
    orig_shape = x.shape
    n_in = orig_shape[-1]
    n_hid = w1.shape[1]
    n_out = w2.shape[1]
    final_linear = w3 is not None

    x2d = x.reshape(-1, n_in)
    m = x2d.shape[0]

    # ---- lane-dense padding: every feature dim -> multiple of 128 ----
    n_in_p = _round_up(n_in, _LANE)
    n_hid_p = _round_up(n_hid, _LANE)
    n_out_p = _round_up(n_out, _LANE)

    x_bytes = jnp.dtype(x.dtype).itemsize
    p_bytes = jnp.dtype(w1.dtype).itemsize

    w_elems = n_in_p * n_hid_p + n_hid_p * n_out_p + \
        (n_out_p * n_out_p if final_linear else 0)
    # Pallas double-buffers every input by default; biases/scale/shift negligible.
    resident_bytes = 2 * w_elems * p_bytes

    # ---- tile_m: amortize per-step overhead, keep >=2 blocks for megacore ----
    m8 = _round_up(m, _SUBLANE)
    if tile_m is None:
        if m8 >= 2 * 512:
            tile_m = 512
        elif m8 >= 2 * _SUBLANE:
            tile_m = max(_SUBLANE, (m8 // 2) // _SUBLANE * _SUBLANE)
        else:
            tile_m = m8
    tile_m = max(_SUBLANE, (tile_m // _SUBLANE) * _SUBLANE)

    def vmem_estimate(tm):
        streamed = 2 * tm * (n_in_p + n_out_p) * x_bytes   # x / out, double-buffered
        interm = tm * (n_hid_p + n_out_p) * 4              # f32 intermediates
        return streamed + interm + resident_bytes

    while tile_m > _SUBLANE and vmem_estimate(tile_m) > _VMEM_BUDGET:
        tile_m = max(_SUBLANE, (tile_m // 2) // _SUBLANE * _SUBLANE)
    # TODO(synk): if resident weights alone exceed the VMEM budget (very large
    # n_hid/n_out), fall back to tiling K/N with a VMEM accumulator.

    m_p = _round_up(m, tile_m)

    def pad2(a, rows, cols, value=0.0):
        a = jnp.asarray(a)
        return jnp.pad(a, ((0, rows - a.shape[0]), (0, cols - a.shape[1])),
                       constant_values=value)

    xp = pad2(x2d, m_p, n_in_p)
    w1p = pad2(w1, n_in_p, n_hid_p)
    b1p = pad2(jnp.reshape(b1, (1, n_hid)), 1, n_hid_p)
    w2p = pad2(w2, n_hid_p, n_out_p)
    b2p = pad2(jnp.reshape(b2, (1, n_out)), 1, n_out_p)

    if bn_scale is None:
        bn_scale = jnp.ones((n_out,), jnp.float32)
    if bn_shift is None:
        bn_shift = jnp.zeros((n_out,), jnp.float32)
    scale_p = pad2(jnp.reshape(bn_scale, (1, n_out)).astype(jnp.float32),
                   1, n_out_p, value=1.0)
    shift_p = pad2(jnp.reshape(bn_shift, (1, n_out)).astype(jnp.float32),
                   1, n_out_p, value=0.0)

    args = [xp, w1p, b1p, w2p, b2p]
    in_specs = [
        pl.BlockSpec((tile_m, n_in_p), lambda i: (i, 0)),    # x tile (streamed)
        pl.BlockSpec((n_in_p, n_hid_p), lambda i: (0, 0)),   # w1 (grid-resident)
        pl.BlockSpec((1, n_hid_p), lambda i: (0, 0)),        # b1
        pl.BlockSpec((n_hid_p, n_out_p), lambda i: (0, 0)),  # w2 (grid-resident)
        pl.BlockSpec((1, n_out_p), lambda i: (0, 0)),        # b2
    ]
    if final_linear:
        w3p = pad2(w3, n_out_p, n_out_p)
        b3p = pad2(jnp.reshape(b3, (1, n_out)), 1, n_out_p)
        args += [w3p, b3p]
        in_specs += [pl.BlockSpec((n_out_p, n_out_p), lambda i: (0, 0)),
                     pl.BlockSpec((1, n_out_p), lambda i: (0, 0))]
    args += [scale_p, shift_p]
    in_specs += [pl.BlockSpec((1, n_out_p), lambda i: (0, 0)),
                 pl.BlockSpec((1, n_out_p), lambda i: (0, 0))]

    grid = (m_p // tile_m,)

    flops = 2 * m_p * w_elems
    transcendentals = m_p * (n_hid_p + n_out_p)              # exp inside ELU
    bytes_accessed = m_p * (n_in_p + n_out_p) * x_bytes + w_elems * p_bytes

    out_padded = pl.pallas_call(
        _make_mlp_kernel(final_linear),
        out_shape=jax.ShapeDtypeStruct((m_p, n_out_p), x.dtype),
        grid_spec=pltpu.PrefetchScalarGridSpec(
            num_scalar_prefetch=0,
            grid=grid,
            in_specs=in_specs,
            out_specs=pl.BlockSpec((tile_m, n_out_p), lambda i: (i, 0)),
        ),
        compiler_params=pltpu.CompilerParams(
            dimension_semantics=("parallel",),
            vmem_limit_bytes=_VMEM_LIMIT,
        ),
        cost_estimate=pl.CostEstimate(
            flops=flops,
            transcendentals=transcendentals,
            bytes_accessed=bytes_accessed,
        ),
    )(*args)

    out = out_padded[:m, :n_out]
    return out.reshape(orig_shape[:-1] + (n_out,))


def mlp_ref(x, w1, b1, w2, b2, w3=None, b3=None, bn_scale=None, bn_shift=None):
    """Pure-JAX reference of the (eval-mode) MLP forward."""
    hp = jax.lax.Precision.HIGHEST
    h = jax.nn.elu(jnp.dot(x, w1, precision=hp) + b1)
    h = jax.nn.elu(jnp.dot(h, w2, precision=hp) + b2)
    if w3 is not None:
        h = jnp.dot(h, w3, precision=hp) + b3
    if bn_scale is not None:
        h = h * bn_scale + bn_shift
    return h


if __name__ == "__main__":
    # Small shapes consistent with the module: batch=2, seq=8, hidden=32.
    batch, seq = 2, 8
    n_in, n_hid, n_out = 32, 32, 32

    key = jax.random.PRNGKey(0)
    kx, k1, k2, k3 = jax.random.split(key, 4)

    x = jax.random.normal(kx, (batch, seq, n_in), dtype=jnp.float32)

    # init_weights(): xavier_normal_ on Linear weights, bias filled with 0.1.
    def xavier(k, fan_in, fan_out):
        std = (2.0 / (fan_in + fan_out)) ** 0.5
        return std * jax.random.normal(k, (fan_in, fan_out), jnp.float32)

    w1 = xavier(k1, n_in, n_hid)
    b1 = jnp.full((n_hid,), 0.1, jnp.float32)
    w2 = xavier(k2, n_hid, n_out)
    b2 = jnp.full((n_out,), 0.1, jnp.float32)

    # BatchNorm1d init: weight=1, bias=0; default running stats mean=0, var=1.
    gamma = jnp.ones((n_out,), jnp.float32)
    beta = jnp.zeros((n_out,), jnp.float32)
    run_mean = jnp.zeros((n_out,), jnp.float32)
    run_var = jnp.ones((n_out,), jnp.float32)
    bn_scale, bn_shift = fold_batchnorm(gamma, beta, run_mean, run_var)

    # Default config: do_prob=0, use_batch_norm=True, final_linear=False (f32).
    out = mlp_forward(x, w1, b1, w2, b2, bn_scale=bn_scale, bn_shift=bn_shift)
    jax.block_until_ready(out)
    ref = mlp_ref(x, w1, b1, w2, b2, bn_scale=bn_scale, bn_shift=bn_shift)
    assert out.shape == (batch, seq, n_out)
    assert jnp.allclose(out, ref, atol=1e-4, rtol=1e-4), "f32 mismatch vs reference"

    # final_linear=True config.
    w3 = xavier(k3, n_out, n_out)
    b3 = jnp.full((n_out,), 0.1, jnp.float32)
    out_fl = mlp_forward(x, w1, b1, w2, b2, w3=w3, b3=b3,
                         bn_scale=bn_scale, bn_shift=bn_shift)
    ref_fl = mlp_ref(x, w1, b1, w2, b2, w3=w3, b3=b3,
                     bn_scale=bn_scale, bn_shift=bn_shift)
    assert jnp.allclose(out_fl, ref_fl, atol=1e-4, rtol=1e-4), "final_linear mismatch"

    # bf16 storage path (halves HBM/VMEM traffic, bf16 MXU on v6e/v7x); f32 accumulation.
    out_bf16 = mlp_forward(x.astype(jnp.bfloat16),
                           w1.astype(jnp.bfloat16), b1.astype(jnp.bfloat16),
                           w2.astype(jnp.bfloat16), b2.astype(jnp.bfloat16),
                           bn_scale=bn_scale, bn_shift=bn_shift)
    jax.block_until_ready(out_bf16)
    assert jnp.allclose(out_bf16.astype(jnp.float32), ref, atol=1e-1, rtol=1e-1), \
        "bf16 mismatch vs f32 reference"

    print("KERNEL_OK")
</pallas_src>

<mosaic_0001>
module attributes {stable_mosaic.version = 11 : i64} {
  func.func @kernel(%arg0: i32, %arg1: memref<8x128xf32, #tpu.memory_space<vmem>>, %arg2: memref<128x128xf32, #tpu.memory_space<vmem>>, %arg3: memref<1x128xf32, #tpu.memory_space<vmem>>, %arg4: memref<128x128xf32, #tpu.memory_space<vmem>>, %arg5: memref<1x128xf32, #tpu.memory_space<vmem>>, %arg6: memref<1x128xf32, #tpu.memory_space<vmem>>, %arg7: memref<1x128xf32, #tpu.memory_space<vmem>>, %arg8: memref<8x128xf32, #tpu.memory_space<vmem>>) attributes {dimension_semantics = [#tpu.dimension_semantics<parallel>], iteration_bounds = array<i64: 2>, scalar_prefetch = 0 : i64, scratch_operands = 0 : i64, tpu.core_type = #tpu.core_type<tc>, window_params = [{transform_indices = @transform_0, window_bounds = array<i64: 8, 128>}, {pipeline_mode = #tpu.pipeline_mode<synchronous>, transform_indices = @transform_1, window_bounds = array<i64: 128, 128>}, {pipeline_mode = #tpu.pipeline_mode<synchronous>, transform_indices = @transform_2, window_bounds = array<i64: 1, 128>}, {pipeline_mode = #tpu.pipeline_mode<synchronous>, transform_indices = @transform_3, window_bounds = array<i64: 128, 128>}, {pipeline_mode = #tpu.pipeline_mode<synchronous>, transform_indices = @transform_4, window_bounds = array<i64: 1, 128>}, {pipeline_mode = #tpu.pipeline_mode<synchronous>, transform_indices = @transform_5, window_bounds = array<i64: 1, 128>}, {pipeline_mode = #tpu.pipeline_mode<synchronous>, transform_indices = @transform_6, window_bounds = array<i64: 1, 128>}, {transform_indices = @transform_7, window_bounds = array<i64: 8, 128>}]} {
    %c0 = arith.constant 0 : index
    %c0_0 = arith.constant 0 : index
    %0 = vector.load %arg1[%c0, %c0_0] : memref<8x128xf32, #tpu.memory_space<vmem>>, vector<8x128xf32>
    %c0_1 = arith.constant 0 : index
    %c0_2 = arith.constant 0 : index
    %1 = vector.load %arg2[%c0_1, %c0_2] : memref<128x128xf32, #tpu.memory_space<vmem>>, vector<128x128xf32>
    %cst = arith.constant dense<0.000000e+00> : vector<8x128xf32>
    %2 = tpu.matmul %0, %1, %cst {dimension_numbers = #tpu.dot_dimension_numbers<[1], [0], [0], [1], [0, 0, 1, 1], [], []>} : vector<8x128xf32>, vector<128x128xf32>, vector<8x128xf32> -> vector<8x128xf32>
    %c0_3 = arith.constant 0 : index
    %c0_4 = arith.constant 0 : index
    %3 = vector.load %arg3[%c0_3, %c0_4] : memref<1x128xf32, #tpu.memory_space<vmem>>, vector<1x128xf32>
    %4 = vector.broadcast %3 : vector<1x128xf32> to vector<8x128xf32>
    %5 = arith.addf %2, %4 : vector<8x128xf32>
    %cst_5 = arith.constant 0.000000e+00 : f32
    %6 = vector.broadcast %cst_5 : f32 to vector<8x128xf32>
    %7 = arith.cmpf ogt, %5, %6 : vector<8x128xf32>
    %cst_6 = arith.constant 0.000000e+00 : f32
    %8 = vector.broadcast %cst_6 : f32 to vector<8x128xf32>
    %9 = arith.minimumf %5, %8 : vector<8x128xf32>
    %10 = math.exp %9 : vector<8x128xf32>
    %cst_7 = arith.constant 1.000000e+00 : f32
    %11 = vector.broadcast %cst_7 : f32 to vector<8x128xf32>
    %12 = arith.subf %10, %11 : vector<8x128xf32>
    %13 = arith.select %7, %5, %12 : vector<8x128xi1>, vector<8x128xf32>
    %c0_8 = arith.constant 0 : index
    %c0_9 = arith.constant 0 : index
    %14 = vector.load %arg4[%c0_8, %c0_9] : memref<128x128xf32, #tpu.memory_space<vmem>>, vector<128x128xf32>
    %cst_10 = arith.constant dense<0.000000e+00> : vector<8x128xf32>
    %15 = tpu.matmul %13, %14, %cst_10 {dimension_numbers = #tpu.dot_dimension_numbers<[1], [0], [0], [1], [0, 0, 1, 1], [], []>} : vector<8x128xf32>, vector<128x128xf32>, vector<8x128xf32> -> vector<8x128xf32>
    %c0_11 = arith.constant 0 : index
    %c0_12 = arith.constant 0 : index
    %16 = vector.load %arg5[%c0_11, %c0_12] : memref<1x128xf32, #tpu.memory_space<vmem>>, vector<1x128xf32>
    %17 = vector.broadcast %16 : vector<1x128xf32> to vector<8x128xf32>
    %18 = arith.addf %15, %17 : vector<8x128xf32>
    %cst_13 = arith.constant 0.000000e+00 : f32
    %19 = vector.broadcast %cst_13 : f32 to vector<8x128xf32>
    %20 = arith.cmpf ogt, %18, %19 : vector<8x128xf32>
    %cst_14 = arith.constant 0.000000e+00 : f32
    %21 = vector.broadcast %cst_14 : f32 to vector<8x128xf32>
    %22 = arith.minimumf %18, %21 : vector<8x128xf32>
    %23 = math.exp %22 : vector<8x128xf32>
    %cst_15 = arith.constant 1.000000e+00 : f32
    %24 = vector.broadcast %cst_15 : f32 to vector<8x128xf32>
    %25 = arith.subf %23, %24 : vector<8x128xf32>
    %26 = arith.select %20, %18, %25 : vector<8x128xi1>, vector<8x128xf32>
    %c0_16 = arith.constant 0 : index
    %c0_17 = arith.constant 0 : index
    %27 = vector.load %arg6[%c0_16, %c0_17] : memref<1x128xf32, #tpu.memory_space<vmem>>, vector<1x128xf32>
    %28 = vector.broadcast %27 : vector<1x128xf32> to vector<8x128xf32>
    %29 = arith.mulf %26, %28 : vector<8x128xf32>
    %c0_18 = arith.constant 0 : index
    %c0_19 = arith.constant 0 : index
    %30 = vector.load %arg7[%c0_18, %c0_19] : memref<1x128xf32, #tpu.memory_space<vmem>>, vector<1x128xf32>
    %31 = vector.broadcast %30 : vector<1x128xf32> to vector<8x128xf32>
    %32 = arith.addf %29, %31 : vector<8x128xf32>
    %c0_20 = arith.constant 0 : index
    %c0_21 = arith.constant 0 : index
    %33 = vector.load %arg8[%c0_20, %c0_21] : memref<8x128xf32, #tpu.memory_space<vmem>>, vector<8x128xf32>
    tpu.vector_store %arg8[%c0_20, %c0_21], %32 {strides = array<i32>} : memref<8x128xf32, #tpu.memory_space<vmem>>, vector<8x128xf32>,
    return
  }
  func.func @transform_0(%arg0: i32) -> (i32, i32) {
    %c0_i32 = arith.constant 0 : i32
    %c0_i32_0 = arith.constant 0 : i32
    return %arg0, %c0_i32 : i32, i32
  }
  func.func @transform_1(%arg0: i32) -> (i32, i32) {
    %c0_i32 = arith.constant 0 : i32
    %c0_i32_0 = arith.constant 0 : i32
    %c0_i32_1 = arith.constant 0 : i32
    return %c0_i32, %c0_i32_0 : i32, i32
  }
  func.func @transform_2(%arg0: i32) -> (i32, i32) {
    %c0_i32 = arith.constant 0 : i32
    %c0_i32_0 = arith.constant 0 : i32
    %c0_i32_1 = arith.constant 0 : i32
    return %c0_i32, %c0_i32_0 : i32, i32
  }
  func.func @transform_3(%arg0: i32) -> (i32, i32) {
    %c0_i32 = arith.constant 0 : i32
    %c0_i32_0 = arith.constant 0 : i32
    %c0_i32_1 = arith.constant 0 : i32
    return %c0_i32, %c0_i32_0 : i32, i32
  }
  func.func @transform_4(%arg0: i32) -> (i32, i32) {
    %c0_i32 = arith.constant 0 : i32
    %c0_i32_0 = arith.constant 0 : i32
    %c0_i32_1 = arith.constant 0 : i32
    return %c0_i32, %c0_i32_0 : i32, i32
  }
  func.func @transform_5(%arg0: i32) -> (i32, i32) {
    %c0_i32 = arith.constant 0 : i32
    %c0_i32_0 = arith.constant 0 : i32
    %c0_i32_1 = arith.constant 0 : i32
    return %c0_i32, %c0_i32_0 : i32, i32
  }
  func.func @transform_6(%arg0: i32) -> (i32, i32) {
    %c0_i32 = arith.constant 0 : i32
    %c0_i32_0 = arith.constant 0 : i32
    %c0_i32_1 = arith.constant 0 : i32
    return %c0_i32, %c0_i32_0 : i32, i32
  }
  func.func @transform_7(%arg0: i32) -> (i32, i32) {
    %c0_i32 = arith.constant 0 : i32
    %c0_i32_0 = arith.constant 0 : i32
    return %arg0, %c0_i32 : i32, i32
  }
}

</mosaic_0001>

<llo_original>
// kernel: tpu_custom_call.1
$region0: #{tpu_custom_call.1}
  #allocation0 [shape = 'u32[]', space=smem, size = 0x4, offset = 0x4, fixed_abs, tag = 'smem constant byte address 0x4 - core index']
  #allocation1 [shape = 'u32[144,128]{1,0:T(1,128)}', space=vmem, size = 0x12000, scoped, tag = 'internal scratch']
  %s0 = inlined_call_operand.hbm [shape: f32[16,128], index: 0, kind: input, shape index: {}]
  %s1 = inlined_call_operand.hbm [shape: f32[128,128], index: 1, kind: input, shape index: {}]
  %s2 = inlined_call_operand.hbm [shape: f32[1,128], index: 2, kind: input, shape index: {}]
  %s3 = inlined_call_operand.hbm [shape: f32[128,128], index: 3, kind: input, shape index: {}]
  %s4 = inlined_call_operand.hbm [shape: f32[1,128], index: 4, kind: input, shape index: {}]
  %s5 = inlined_call_operand.hbm [shape: f32[1,128], index: 5, kind: input, shape index: {}]
  %s6 = inlined_call_operand.hbm [shape: f32[1,128], index: 6, kind: input, shape index: {}]
  %s7 = inlined_call_operand.hbm [shape: f32[16,128], index: 7, kind: output, shape index: {}]
  %s8 = sld [smem:[#allocation0]]
  $region89: #{tpu_custom_call.1} parent=0
    _
  %s10 = ssub.s32 1, %s8
  %s11 = scalar_select 0, %s10, %s8
  $region1: #{tpu_custom_call.1} parent=0
    #allocation2 [shape = 'u8[8192]{0}', space=vmem, size = 0x2000, scoped, tag = 'input window, operand 0']
    #allocation3 [shape = 's32[2]{0}', space=sflag, size = 0x8, scoped, tag = 'scoped memory for tpu_custom_call.1']
    #allocation4 [shape = 's32[2]{0}', space=sflag, size = 0x8, scoped, tag = 'scoped memory for tpu_custom_call.1']
    #allocation5 [shape = 'u8[65536]{0}', space=vmem, size = 0x10000, scoped, tag = 'input window, operand 1, single buffered']
    #allocation6 [shape = 's32[1]{0}', space=sflag, size = 0x4, scoped, tag = 'scoped memory for tpu_custom_call.1']
    #allocation7 [shape = 'u8[512]{0}', space=vmem, size = 0x400, scoped, tag = 'input window, operand 2, single buffered']
    #allocation8 [shape = 'u8[65536]{0}', space=vmem, size = 0x10000, scoped, tag = 'input window, operand 3, single buffered']
    #allocation9 [shape = 's32[1]{0}', space=sflag, size = 0x4, scoped, tag = 'scoped memory for tpu_custom_call.1']
    #allocation10 [shape = 'u8[512]{0}', space=vmem, size = 0x400, scoped, tag = 'input window, operand 4, single buffered']
    #allocation11 [shape = 'u8[512]{0}', space=vmem, size = 0x400, scoped, tag = 'input window, operand 5, single buffered']
    #allocation12 [shape = 's32[1]{0}', space=sflag, size = 0x4, scoped, tag = 'scoped memory for tpu_custom_call.1']
    #allocation13 [shape = 'u8[512]{0}', space=vmem, size = 0x400, scoped, tag = 'input window, operand 6, single buffered']
    #allocation14 [shape = 'u8[8192]{0}', space=vmem, size = 0x2000, scoped, tag = 'output window, operand 0']
    %12 = vsyncpa [#allocation3], 0
    %s13 = scalar_lea.sflag [#allocation3], 1
    %14 = vsyncpa %s13, 0
    %15 = vsyncpa [#allocation6], 0
    %16 = vsyncpa [#allocation9], 0
    %17 = vsyncpa [#allocation12], 0
    %18 = vsyncpa [#allocation4], 0
    %s19 = scalar_lea.sflag [#allocation4], 1
    %20 = vsyncpa %s19, 0
    loop: start=0, step=1, limit=4
    $region2: #{tpu_custom_call.1} parent=1 // loop_pre_header
      _
    $region3: #{tpu_custom_call.1} parent=1 // loop_header
      %s22 = sphi 0, %s26
      %p23 = scmp.ge.s32.totalorder %s22, 4
      %s32 = sphi 0, %s34
      %s35 = sphi 0, %s32
      %s36 = sphi 0, %s35
      %s52 = sphi 0, %s36
      %s56 = sphi 0, %s56
      %s58 = sphi 0, %s56
      %s59 = sphi 0, %s58
      %s73 = sphi 0, %s59
      %s77 = sphi 0, %s77
      %s79 = sphi 0, %s77
      %s80 = sphi 0, %s79
      %s94 = sphi 0, %s80
      %s98 = sphi 0, %s98
      %s100 = sphi 0, %s98
      %s101 = sphi 0, %s100
      %s115 = sphi 0, %s101
      %s119 = sphi 0, %s119
      %s121 = sphi 0, %s119
      %s122 = sphi 0, %s121
      %s136 = sphi 0, %s122
      %s140 = sphi 0, %s140
      %s142 = sphi 0, %s140
      %s143 = sphi 0, %s142
      %s157 = sphi 0, %s143
      %s161 = sphi 0, %s161
      %s163 = sphi 0, %s161
      %s164 = sphi 0, %s163
      %s178 = sphi 0, %s164
      %s184 = sphi 0, %s186
      %s187 = sphi 0, %s184
      %s188 = sphi 0, %s187
      %s204 = sphi 0, %s188
    $region4: #{tpu_custom_call.1} parent=1 // loop_header_branch
      %25 = sbr.rel (%p23) target = $region8
    $region5: #{tpu_custom_call.1} parent=1 // loop_body
      %s27 = ssub.s32 %s22, 1
      %s28 = ssub.s32 %s22, 2
      %s29 = sadd.s32 %s22, 1
      %s30 = ssub.s32 %s22, %s29
      %p31 = scmp.eq.s32.totalorder %s30, 0
      %s33 = sadd.s32 %s32, 1
      %s34 = scalar_select %p31, %s32, %s33
      %p37 = pneg %p31
      %p38 = scmp.eq.s32.totalorder %s22, 1
      %p39 = por %p37, %p38
      %p40 = scmp.ne.s32.totalorder %s32, %s35
      %p41 = scmp.eq.s32.totalorder %s22, 0
      %p42 = por %p40, %p41
      %p43 = scmp.ne.s32.totalorder %s32, %s35
      %p44 = scmp.eq.s32.totalorder %s27, 1
      %p45 = por %p43, %p44
      %p46 = scmp.ne.s32.totalorder %s35, %s36
      %p47 = scmp.eq.s32.totalorder %s27, 0
      %p48 = por %p46, %p47
      %p49 = scmp.ne.s32.totalorder %s35, %s36
      %p50 = scmp.eq.s32.totalorder %s28, 1
      %p51 = por %p49, %p50
      %p53 = scmp.ne.s32.totalorder %s36, %s52
      %p54 = scmp.eq.s32.totalorder %s28, 0
      %p55 = por %p53, %p54
      %s57 = sadd.s32 %s56, 1
      %p60 = scmp.eq.s32.totalorder %s22, 1
      %p61 = scmp.ne.s32.totalorder %s56, %s58
      %p62 = scmp.eq.s32.totalorder %s22, 0
      %p63 = por %p61, %p62
      %p64 = scmp.ne.s32.totalorder %s56, %s58
      %p65 = scmp.eq.s32.totalorder %s27, 1
      %p66 = por %p64, %p65
      %p67 = scmp.ne.s32.totalorder %s58, %s59
      %p68 = scmp.eq.s32.totalorder %s27, 0
      %p69 = por %p67, %p68
      %p70 = scmp.ne.s32.totalorder %s58, %s59
      %p71 = scmp.eq.s32.totalorder %s28, 1
      %p72 = por %p70, %p71
      %p74 = scmp.ne.s32.totalorder %s59, %s73
      %p75 = scmp.eq.s32.totalorder %s28, 0
      %p76 = por %p74, %p75
      %s78 = sadd.s32 %s77, 1
      %p81 = scmp.eq.s32.totalorder %s22, 1
      %p82 = scmp.ne.s32.totalorder %s77, %s79
      %p83 = scmp.eq.s32.totalorder %s22, 0
      %p84 = por %p82, %p83
      %p85 = scmp.ne.s32.totalorder %s77, %s79
      %p86 = scmp.eq.s32.totalorder %s27, 1
      %p87 = por %p85, %p86
      %p88 = scmp.ne.s32.totalorder %s79, %s80
      %p89 = scmp.eq.s32.totalorder %s27, 0
      %p90 = por %p88, %p89
      %p91 = scmp.ne.s32.totalorder %s79, %s80
      %p92 = scmp.eq.s32.totalorder %s28, 1
      %p93 = por %p91, %p92
      %p95 = scmp.ne.s32.totalorder %s80, %s94
      %p96 = scmp.eq.s32.totalorder %s28, 0
      %p97 = por %p95, %p96
      %s99 = sadd.s32 %s98, 1
      %p102 = scmp.eq.s32.totalorder %s22, 1
      %p103 = scmp.ne.s32.totalorder %s98, %s100
      %p104 = scmp.eq.s32.totalorder %s22, 0
      %p105 = por %p103, %p104
      %p106 = scmp.ne.s32.totalorder %s98, %s100
      %p107 = scmp.eq.s32.totalorder %s27, 1
      %p108 = por %p106, %p107
      %p109 = scmp.ne.s32.totalorder %s100, %s101
      %p110 = scmp.eq.s32.totalorder %s27, 0
      %p111 = por %p109, %p110
      %p112 = scmp.ne.s32.totalorder %s100, %s101
      %p113 = scmp.eq.s32.totalorder %s28, 1
      %p114 = por %p112, %p113
      %p116 = scmp.ne.s32.totalorder %s101, %s115
      %p117 = scmp.eq.s32.totalorder %s28, 0
      %p118 = por %p116, %p117
      %s120 = sadd.s32 %s119, 1
      %p123 = scmp.eq.s32.totalorder %s22, 1
      %p124 = scmp.ne.s32.totalorder %s119, %s121
      %p125 = scmp.eq.s32.totalorder %s22, 0
      %p126 = por %p124, %p125
      %p127 = scmp.ne.s32.totalorder %s119, %s121
      %p128 = scmp.eq.s32.totalorder %s27, 1
      %p129 = por %p127, %p128
      %p130 = scmp.ne.s32.totalorder %s121, %s122
      %p131 = scmp.eq.s32.totalorder %s27, 0
      %p132 = por %p130, %p131
      %p133 = scmp.ne.s32.totalorder %s121, %s122
      %p134 = scmp.eq.s32.totalorder %s28, 1
      %p135 = por %p133, %p134
      %p137 = scmp.ne.s32.totalorder %s122, %s136
      %p138 = scmp.eq.s32.totalorder %s28, 0
      %p139 = por %p137, %p138
      %s141 = sadd.s32 %s140, 1
      %p144 = scmp.eq.s32.totalorder %s22, 1
      %p145 = scmp.ne.s32.totalorder %s140, %s142
      %p146 = scmp.eq.s32.totalorder %s22, 0
      %p147 = por %p145, %p146
      %p148 = scmp.ne.s32.totalorder %s140, %s142
      %p149 = scmp.eq.s32.totalorder %s27, 1
      %p150 = por %p148, %p149
      %p151 = scmp.ne.s32.totalorder %s142, %s143
      %p152 = scmp.eq.s32.totalorder %s27, 0
      %p153 = por %p151, %p152
      %p154 = scmp.ne.s32.totalorder %s142, %s143
      %p155 = scmp.eq.s32.totalorder %s28, 1
      %p156 = por %p154, %p155
      %p158 = scmp.ne.s32.totalorder %s143, %s157
      %p159 = scmp.eq.s32.totalorder %s28, 0
      %p160 = por %p158, %p159
      %s162 = sadd.s32 %s161, 1
      %p165 = scmp.eq.s32.totalorder %s22, 1
      %p166 = scmp.ne.s32.totalorder %s161, %s163
      %p167 = scmp.eq.s32.totalorder %s22, 0
      %p168 = por %p166, %p167
      %p169 = scmp.ne.s32.totalorder %s161, %s163
      %p170 = scmp.eq.s32.totalorder %s27, 1
      %p171 = por %p169, %p170
      %p172 = scmp.ne.s32.totalorder %s163, %s164
      %p173 = scmp.eq.s32.totalorder %s27, 0
      %p174 = por %p172, %p173
      %p175 = scmp.ne.s32.totalorder %s163, %s164
      %p176 = scmp.eq.s32.totalorder %s28, 1
      %p177 = por %p175, %p176
      %p179 = scmp.ne.s32.totalorder %s164, %s178
      %p180 = scmp.eq.s32.totalorder %s28, 0
      %p181 = por %p179, %p180
      %s182 = ssub.s32 %s22, %s29
      %p183 = scmp.eq.s32.totalorder %s182, 0
      %s185 = sadd.s32 %s184, 1
      %s186 = scalar_select %p183, %s184, %s185
      %p189 = pneg %p183
      %p190 = scmp.eq.s32.totalorder %s22, 1
      %p191 = por %p189, %p190
      %p192 = scmp.ne.s32.totalorder %s184, %s187
      %p193 = scmp.eq.s32.totalorder %s22, 0
      %p194 = por %p192, %p193
      %p195 = scmp.ne.s32.totalorder %s184, %s187
      %p196 = scmp.eq.s32.totalorder %s27, 1
      %p197 = por %p195, %p196
      %p198 = scmp.ne.s32.totalorder %s187, %s188
      %p199 = scmp.eq.s32.totalorder %s27, 0
      %p200 = por %p198, %p199
      %p201 = scmp.ne.s32.totalorder %s187, %s188
      %p202 = scmp.eq.s32.totalorder %s28, 1
      %p203 = por %p201, %p202
      %p205 = scmp.ne.s32.totalorder %s188, %s204
      %p206 = scmp.eq.s32.totalorder %s28, 0
      %p207 = por %p205, %p206
      %p208 = scmp.le.s32.totalorder 1, %s22
      %p209 = scmp.lt.s32.totalorder %s22, 3
      %p210 = pnand %p208, %p209
      %p211 = pneg %p210
      // Predicated region
      $region9: #{tpu_custom_call.1} parent=5 // pred_check
        _
      $region10: #{tpu_custom_call.1} parent=5 // pred_check_branch
        %213 = sbr.rel (%p210) target = $region12
      $region11: #{tpu_custom_call.1} parent=5 // pred_region
        %s214 = ssub.s32 %s22, 1
        // Predicated region
        $region13: #{tpu_custom_call.1} parent=11 // pred_check
          %p215 = pneg %p69
        $region14: #{tpu_custom_call.1} parent=11 // pred_check_branch
          %217 = sbr.rel (%p215) target = $region16
        $region15: #{tpu_custom_call.1} parent=11 // pred_region
          %s219 = ssub.s32 2048, 2048
          %220 = vsyncadd [#allocation6], %s219
          %s221 = sshll.u32 [#allocation5], 4
          %s222 = int_to_ptr.vmem [resolvable:$true] %s221
          %227 = dma.hbm_to_vmem [thread:$0]  %s1, 2048, %s222, [#allocation6], 128, 128, 8
        $region16: #{tpu_custom_call.1} parent=11 // pred_fallthru
          _
        // Predicated region
        $region17: #{tpu_custom_call.1} parent=11 // pred_check
          %p228 = pneg %p90
        $region18: #{tpu_custom_call.1} parent=11 // pred_check_branch
          %230 = sbr.rel (%p228) target = $region20
        $region19: #{tpu_custom_call.1} parent=11 // pred_region
          %s232 = ssub.s32 16, 16
          %233 = vsyncadd [#allocation6], %s232
          %s235 = sshll.u32 [#allocation7], 4
          %s236 = int_to_ptr.vmem [resolvable:$true] %s235
          %238 = dma.hbm_to_vmem [thread:$0]  %s2, 16, %s236, [#allocation6]
        $region20: #{tpu_custom_call.1} parent=11 // pred_fallthru
          _
        // Predicated region
        $region21: #{tpu_custom_call.1} parent=11 // pred_check
          %p239 = pneg %p111
        $region22: #{tpu_custom_call.1} parent=11 // pred_check_branch
          %241 = sbr.rel (%p239) target = $region24
        $region23: #{tpu_custom_call.1} parent=11 // pred_region
          %s243 = ssub.s32 2048, 2048
          %244 = vsyncadd [#allocation9], %s243
          %s245 = sshll.u32 [#allocation8], 4
          %s246 = int_to_ptr.vmem [resolvable:$true] %s245
          %251 = dma.hbm_to_vmem [thread:$0]  %s3, 2048, %s246, [#allocation9], 128, 128, 8
        $region24: #{tpu_custom_call.1} parent=11 // pred_fallthru
          _
        // Predicated region
        $region25: #{tpu_custom_call.1} parent=11 // pred_check
          %p252 = pneg %p132
        $region26: #{tpu_custom_call.1} parent=11 // pred_check_branch
          %254 = sbr.rel (%p252) target = $region28
        $region27: #{tpu_custom_call.1} parent=11 // pred_region
          %s256 = ssub.s32 16, 16
          %257 = vsyncadd [#allocation9], %s256
          %s259 = sshll.u32 [#allocation10], 4
          %s260 = int_to_ptr.vmem [resolvable:$true] %s259
          %262 = dma.hbm_to_vmem [thread:$0]  %s4, 16, %s260, [#allocation9]
        $region28: #{tpu_custom_call.1} parent=11 // pred_fallthru
          _
        // Predicated region
        $region29: #{tpu_custom_call.1} parent=11 // pred_check
          %p263 = pneg %p153
        $region30: #{tpu_custom_call.1} parent=11 // pred_check_branch
          %265 = sbr.rel (%p263) target = $region32
        $region31: #{tpu_custom_call.1} parent=11 // pred_region
          %s267 = ssub.s32 16, 16
          %268 = vsyncadd [#allocation12], %s267
          %s270 = sshll.u32 [#allocation11], 4
          %s271 = int_to_ptr.vmem [resolvable:$true] %s270
          %273 = dma.hbm_to_vmem [thread:$0]  %s5, 16, %s271, [#allocation12]
        $region32: #{tpu_custom_call.1} parent=11 // pred_fallthru
          _
        // Predicated region
        $region33: #{tpu_custom_call.1} parent=11 // pred_check
          %p274 = pneg %p174
        $region34: #{tpu_custom_call.1} parent=11 // pred_check_branch
          %276 = sbr.rel (%p274) target = $region36
        $region35: #{tpu_custom_call.1} parent=11 // pred_region
          %s278 = ssub.s32 16, 16
          %279 = vsyncadd [#allocation12], %s278
          %s281 = sshll.u32 [#allocation13], 4
          %s282 = int_to_ptr.vmem [resolvable:$true] %s281
          %284 = dma.hbm_to_vmem [thread:$0]  %s6, 16, %s282, [#allocation12]
        $region36: #{tpu_custom_call.1} parent=11 // pred_fallthru
          _
      $region12: #{tpu_custom_call.1} parent=5 // pred_fallthru
        _
      %p285 = scmp.lt.s32.totalorder %s22, 2
      // Predicated region
      $region37: #{tpu_custom_call.1} parent=5 // pred_check
        %p286 = pneg %p285
      $region38: #{tpu_custom_call.1} parent=5 // pred_check_branch
        %288 = sbr.rel (%p286) target = $region40
      $region39: #{tpu_custom_call.1} parent=5 // pred_region
        // Predicated region
        $region41: #{tpu_custom_call.1} parent=39 // pred_check
          %p289 = pneg %p42
        $region42: #{tpu_custom_call.1} parent=39 // pred_check_branch
          %291 = sbr.rel (%p289) target = $region44
        $region43: #{tpu_custom_call.1} parent=39 // pred_region
          %s292 = sand.u32 %s32, 1
          %s293 = scalar_lea.sflag [#allocation3], %s292
          %s294 = sand.u32 %s32, 1
          %s295 = smul.addr %s294, 8
          %s296 = scalar_lea.vmem [#allocation2], %s295
          %s298 = ssub.s32 128, 128
          %299 = vsyncadd %s293, %s298
          %s300 = smul.addr %s22, 128
          %s301 = scalar_lea.hbm %s0, %s300
          %s303 = sshll.u32 %s296, 4
          %s304 = int_to_ptr.vmem [resolvable:$true] %s303
          %306 = dma.hbm_to_vmem [thread:$0]  %s301, 128, %s304, %s293
        $region44: #{tpu_custom_call.1} parent=39 // pred_fallthru
          _
      $region40: #{tpu_custom_call.1} parent=5 // pred_fallthru
        _
      %p307 = scmp.le.s32.totalorder 1, %s22
      %p308 = scmp.lt.s32.totalorder %s22, 3
      %p309 = pnand %p307, %p308
      %p310 = pneg %p309
      // Predicated region
      $region45: #{tpu_custom_call.1} parent=5 // pred_check
        _
      $region46: #{tpu_custom_call.1} parent=5 // pred_check_branch
        %312 = sbr.rel (%p309) target = $region48
      $region47: #{tpu_custom_call.1} parent=5 // pred_region
        %s313 = ssub.s32 %s22, 1
        %s314 = sand.u32 %s35, 1
        %s315 = scalar_lea.sflag [#allocation3], %s314
        %s316 = sand.u32 %s35, 1
        %s317 = smul.addr %s316, 8
        %s318 = scalar_lea.vmem [#allocation2], %s317
        // Predicated region
        $region49: #{tpu_custom_call.1} parent=47 // pred_check
          %p319 = pneg %p48
        $region50: #{tpu_custom_call.1} parent=47 // pred_check_branch
          %321 = sbr.rel (%p319) target = $region52
        $region51: #{tpu_custom_call.1} parent=47 // pred_region
          %322 = dma.done %s315, 128
        $region52: #{tpu_custom_call.1} parent=47 // pred_fallthru
          _
        // Predicated region
        $region53: #{tpu_custom_call.1} parent=47 // pred_check
          %p323 = pneg %p69
        $region54: #{tpu_custom_call.1} parent=47 // pred_check_branch
          %325 = sbr.rel (%p323) target = $region56
        $region55: #{tpu_custom_call.1} parent=47 // pred_region
          %326 = dma.done [#allocation6], 2048
        $region56: #{tpu_custom_call.1} parent=47 // pred_fallthru
          _
        // Predicated region
        $region57: #{tpu_custom_call.1} parent=47 // pred_check
          %p327 = pneg %p90
        $region58: #{tpu_custom_call.1} parent=47 // pred_check_branch
          %329 = sbr.rel (%p327) target = $region60
        $region59: #{tpu_custom_call.1} parent=47 // pred_region
          %330 = dma.done [#allocation6], 16
        $region60: #{tpu_custom_call.1} parent=47 // pred_fallthru
          _
        // Predicated region
        $region61: #{tpu_custom_call.1} parent=47 // pred_check
          %p331 = pneg %p111
        $region62: #{tpu_custom_call.1} parent=47 // pred_check_branch
          %333 = sbr.rel (%p331) target = $region64
        $region63: #{tpu_custom_call.1} parent=47 // pred_region
          %334 = dma.done [#allocation9], 2048
        $region64: #{tpu_custom_call.1} parent=47 // pred_fallthru
          _
        // Predicated region
        $region65: #{tpu_custom_call.1} parent=47 // pred_check
          %p335 = pneg %p132
        $region66: #{tpu_custom_call.1} parent=47 // pred_check_branch
          %337 = sbr.rel (%p335) target = $region68
        $region67: #{tpu_custom_call.1} parent=47 // pred_region
          %338 = dma.done [#allocation9], 16
        $region68: #{tpu_custom_call.1} parent=47 // pred_fallthru
          _
        // Predicated region
        $region69: #{tpu_custom_call.1} parent=47 // pred_check
          %p339 = pneg %p153
        $region70: #{tpu_custom_call.1} parent=47 // pred_check_branch
          %341 = sbr.rel (%p339) target = $region72
        $region71: #{tpu_custom_call.1} parent=47 // pred_region
          %342 = dma.done [#allocation12], 16
        $region72: #{tpu_custom_call.1} parent=47 // pred_fallthru
          _
        // Predicated region
        $region73: #{tpu_custom_call.1} parent=47 // pred_check
          %p343 = pneg %p174
        $region74: #{tpu_custom_call.1} parent=47 // pred_check_branch
          %345 = sbr.rel (%p343) target = $region76
        $region75: #{tpu_custom_call.1} parent=47 // pred_region
          %346 = dma.done [#allocation12], 16
        $region76: #{tpu_custom_call.1} parent=47 // pred_fallthru
          _
        %s347 = sand.u32 %s35, 1
        %s348 = scalar_lea.sflag [#allocation3], %s347
        %s349 = sand.u32 %s35, 1
        %s350 = smul.addr %s349, 8
        %s351 = scalar_lea.vmem [#allocation2], %s350
        %p352 = pneg %p48
        %p353 = pneg %p45
        %p354 = pneg %p69
        %p355 = pneg %p66
        %p356 = pneg %p90
        %p357 = pneg %p87
        %p358 = pneg %p111
        %p359 = pneg %p108
        %p360 = pneg %p132
        %p361 = pneg %p129
        %p362 = pneg %p153
        %p363 = pneg %p150
        %p364 = pneg %p174
        %p365 = pneg %p171
        %p366 = pneg %p200
        %p367 = pneg %p197
        %s368 = sand.u32 %s187, 1
        %s369 = scalar_lea.sflag [#allocation4], %s368
        %s370 = sand.u32 %s187, 1
        %s371 = smul.addr %s370, 8
        %s372 = scalar_lea.vmem [#allocation14], %s371
        %v373 = vld [vmem:[%s318] sm:$0xff]
        %v374 = vld [vmem:[#allocation5] sm:$0xff]
        %v375 = vld [vmem:[#allocation5 + $0x8] sm:$0xff]
        %v376 = vld [vmem:[#allocation5 + $0x10] sm:$0xff]
        %v377 = vld [vmem:[#allocation5 + $0x18] sm:$0xff]
        %v378 = vld [vmem:[#allocation5 + $0x20] sm:$0xff]
        %v379 = vld [vmem:[#allocation5 + $0x28] sm:$0xff]
        %v380 = vld [vmem:[#allocation5 + $0x30] sm:$0xff]
        %v381 = vld [vmem:[#allocation5 + $0x38] sm:$0xff]
        %v382 = vld [vmem:[#allocation5 + $0x40] sm:$0xff]
        %v383 = vld [vmem:[#allocation5 + $0x48] sm:$0xff]
        %v384 = vld [vmem:[#allocation5 + $0x50] sm:$0xff]
        %v385 = vld [vmem:[#allocation5 + $0x58] sm:$0xff]
        %v386 = vld [vmem:[#allocation5 + $0x60] sm:$0xff]
        %v387 = vld [vmem:[#allocation5 + $0x68] sm:$0xff]
        %v388 = vld [vmem:[#allocation5 + $0x70] sm:$0xff]
        %v389 = vld [vmem:[#allocation5 + $0x78] sm:$0xff]
        %v390 = vld [vmem:[#allocation7] sm:$0x1]
        %v392 = vlaneseq
        %v393 = vshrl.u32 %v392, 7
        %v394 = vsub.s32 0, %v393
        %v395 = vrot.slane %v390, %v394
        %397 = vmatprep.subr.mxu0 0.0
        %398 = vmatpush1.msra.mxu0 %v374
        %399 = vmatprep.subr.mxu0 0.0
        %400 = vmatpush1.msra.mxu0 %v375
        %401 = vmatprep.subr.mxu0 0.0
        %402 = vmatpush1.msra.mxu0 %v376
        %403 = vmatprep.subr.mxu0 0.0
        %404 = vmatpush1.msra.mxu0 %v377
        %405 = vmatprep.subr.mxu0 0.0
        %406 = vmatpush1.msra.mxu0 %v378
        %407 = vmatprep.subr.mxu0 0.0
        %408 = vmatpush1.msra.mxu0 %v379
        %409 = vmatprep.subr.mxu0 0.0
        %410 = vmatpush1.msra.mxu0 %v380
        %411 = vmatprep.subr.mxu0 0.0
        %412 = vmatpush1.msra.mxu0 %v381
        %413 = vmatprep.subr.mxu0 0.0
        %414 = vmatpush1.msra.mxu0 %v382
        %415 = vmatprep.subr.mxu0 0.0
        %416 = vmatpush1.msra.mxu0 %v383
        %417 = vmatprep.subr.mxu0 0.0
        %418 = vmatpush1.msra.mxu0 %v384
        %419 = vmatprep.subr.mxu0 0.0
        %420 = vmatpush1.msra.mxu0 %v385
        %421 = vmatprep.subr.mxu0 0.0
        %422 = vmatpush1.msra.mxu0 %v386
        %423 = vmatprep.subr.mxu0 0.0
        %424 = vmatpush1.msra.mxu0 %v387
        %425 = vmatprep.subr.mxu0 0.0
        %426 = vmatpush1.msra.mxu0 %v388
        %427 = vmatprep.subr.mxu0 0.0
        %428 = vmatpush1.msra.mxu0 %v389
        %429 = vmatprep.subr.mxu0 0.0
        %430 = vmatpush1.msra.mxu0 0.0
        %431 = vmatprep.subr.mxu0 0.0
        %432 = vmatpush1.msra.mxu0 0.0
        %433 = vmatprep.subr.mxu0 0.0
        %434 = vmatpush1.msra.mxu0 0.0
        %435 = vmatprep.subr.mxu0 0.0
        %436 = vmatpush1.msra.mxu0 0.0
        %437 = vmatprep.subr.mxu0 0.0
        %438 = vmatpush1.msra.mxu0 0.0
        %439 = vmatprep.subr.mxu0 0.0
        %440 = vmatpush1.msra.mxu0 0.0
        %441 = vmatprep.subr.mxu0 0.0
        %442 = vmatpush1.msra.mxu0 0.0
        %443 = vmatprep.subr.mxu0 0.0
        %444 = vmatpush1.msra.mxu0 0.0
        %445 = vmatprep.subr.mxu0 0.0
        %446 = vmatpush1.msra.mxu0 0.0
        %447 = vmatprep.subr.mxu0 0.0
        %448 = vmatpush1.msra.mxu0 0.0
        %449 = vmatprep.subr.mxu0 0.0
        %450 = vmatpush1.msra.mxu0 0.0
        %451 = vmatprep.subr.mxu0 0.0
        %452 = vmatpush1.msra.mxu0 0.0
        %453 = vmatprep.subr.mxu0 0.0
        %454 = vmatpush1.msra.mxu0 0.0
        %455 = vmatprep.subr.mxu0 0.0
        %456 = vmatpush1.msra.mxu0 0.0
        %457 = vmatprep.subr.mxu0 0.0
        %458 = vmatpush1.msra.mxu0 0.0
        %459 = vmatprep.subr.mxu0 0.0
        %460 = vmatpush1.msra.mxu0 0.0
        %461 = vmatprep.mubr.f32.mxu0 0.0
        %462 = vmatmul.mubr.f32.gmra.mrb[0].mxu0 %v373
        %v463 = vpop.f32.mrb[0].mxu0
        %v464 = vadd.f32 %v395, %v463
        %v465 = vpop.f32.mrb[0].mxu0
        %466 = vdwg.mxu0
        %vm467 = vcmp.gt.f32.partialorder %v464, 0.0
        %v468 = vmin.f32 %v464, 0.0
        %v469 = vmul.f32 %v468, 1.442695
        %v470 = vpow.pop %v469
        %v471 = vsub.f32 %v470, 1.0
        %v472 = vsel %vm467, %v464, %v471
        %v473 = vld [vmem:[#allocation8] sm:$0xff]
        %v474 = vld [vmem:[#allocation8 + $0x8] sm:$0xff]
        %v475 = vld [vmem:[#allocation8 + $0x10] sm:$0xff]
        %v476 = vld [vmem:[#allocation8 + $0x18] sm:$0xff]
        %v477 = vld [vmem:[#allocation8 + $0x20] sm:$0xff]
        %v478 = vld [vmem:[#allocation8 + $0x28] sm:$0xff]
        %v479 = vld [vmem:[#allocation8 + $0x30] sm:$0xff]
        %v480 = vld [vmem:[#allocation8 + $0x38] sm:$0xff]
        %v481 = vld [vmem:[#allocation8 + $0x40] sm:$0xff]
        %v482 = vld [vmem:[#allocation8 + $0x48] sm:$0xff]
        %v483 = vld [vmem:[#allocation8 + $0x50] sm:$0xff]
        %v484 = vld [vmem:[#allocation8 + $0x58] sm:$0xff]
        %v485 = vld [vmem:[#allocation8 + $0x60] sm:$0xff]
        %v486 = vld [vmem:[#allocation8 + $0x68] sm:$0xff]
        %v487 = vld [vmem:[#allocation8 + $0x70] sm:$0xff]
        %v488 = vld [vmem:[#allocation8 + $0x78] sm:$0xff]
        %v489 = vld [vmem:[#allocation10] sm:$0x1]
        %v491 = vlaneseq
        %v492 = vshrl.u32 %v491, 7
        %v493 = vsub.s32 0, %v492
        %v494 = vrot.slane %v489, %v493
        %496 = vmatprep.subr.mxu0 0.0
        %497 = vmatpush1.msra.mxu0 %v473
        %498 = vmatprep.subr.mxu0 0.0
        %499 = vmatpush1.msra.mxu0 %v474
        %500 = vmatprep.subr.mxu0 0.0
        %501 = vmatpush1.msra.mxu0 %v475
        %502 = vmatprep.subr.mxu0 0.0
        %503 = vmatpush1.msra.mxu0 %v476
        %504 = vmatprep.subr.mxu0 0.0
        %505 = vmatpush1.msra.mxu0 %v477
        %506 = vmatprep.subr.mxu0 0.0
        %507 = vmatpush1.msra.mxu0 %v478
        %508 = vmatprep.subr.mxu0 0.0
        %509 = vmatpush1.msra.mxu0 %v479
        %510 = vmatprep.subr.mxu0 0.0
        %511 = vmatpush1.msra.mxu0 %v480
        %512 = vmatprep.subr.mxu0 0.0
        %513 = vmatpush1.msra.mxu0 %v481
        %514 = vmatprep.subr.mxu0 0.0
        %515 = vmatpush1.msra.mxu0 %v482
        %516 = vmatprep.subr.mxu0 0.0
        %517 = vmatpush1.msra.mxu0 %v483
        %518 = vmatprep.subr.mxu0 0.0
        %519 = vmatpush1.msra.mxu0 %v484
        %520 = vmatprep.subr.mxu0 0.0
        %521 = vmatpush1.msra.mxu0 %v485
        %522 = vmatprep.subr.mxu0 0.0
        %523 = vmatpush1.msra.mxu0 %v486
        %524 = vmatprep.subr.mxu0 0.0
        %525 = vmatpush1.msra.mxu0 %v487
        %526 = vmatprep.subr.mxu0 0.0
        %527 = vmatpush1.msra.mxu0 %v488
        %528 = vmatprep.subr.mxu0 0.0
        %529 = vmatpush1.msra.mxu0 0.0
        %530 = vmatprep.subr.mxu0 0.0
        %531 = vmatpush1.msra.mxu0 0.0
        %532 = vmatprep.subr.mxu0 0.0
        %533 = vmatpush1.msra.mxu0 0.0
        %534 = vmatprep.subr.mxu0 0.0
        %535 = vmatpush1.msra.mxu0 0.0
        %536 = vmatprep.subr.mxu0 0.0
        %537 = vmatpush1.msra.mxu0 0.0
        %538 = vmatprep.subr.mxu0 0.0
        %539 = vmatpush1.msra.mxu0 0.0
        %540 = vmatprep.subr.mxu0 0.0
        %541 = vmatpush1.msra.mxu0 0.0
        %542 = vmatprep.subr.mxu0 0.0
        %543 = vmatpush1.msra.mxu0 0.0
        %544 = vmatprep.subr.mxu0 0.0
        %545 = vmatpush1.msra.mxu0 0.0
        %546 = vmatprep.subr.mxu0 0.0
        %547 = vmatpush1.msra.mxu0 0.0
        %548 = vmatprep.subr.mxu0 0.0
        %549 = vmatpush1.msra.mxu0 0.0
        %550 = vmatprep.subr.mxu0 0.0
        %551 = vmatpush1.msra.mxu0 0.0
        %552 = vmatprep.subr.mxu0 0.0
        %553 = vmatpush1.msra.mxu0 0.0
        %554 = vmatprep.subr.mxu0 0.0
        %555 = vmatpush1.msra.mxu0 0.0
        %556 = vmatprep.subr.mxu0 0.0
        %557 = vmatpush1.msra.mxu0 0.0
        %558 = vmatprep.subr.mxu0 0.0
        %559 = vmatpush1.msra.mxu0 0.0
        %560 = vmatprep.mubr.f32.mxu0 0.0
        %561 = vmatmul.mubr.f32.gmra.mrb[0].mxu0 %v472
        %v562 = vpop.f32.mrb[0].mxu0
        %v563 = vadd.f32 %v494, %v562
        %v564 = vpop.f32.mrb[0].mxu0
        %565 = vdwg.mxu0
        %vm566 = vcmp.gt.f32.partialorder %v563, 0.0
        %v567 = vmin.f32 %v563, 0.0
        %v568 = vmul.f32 %v567, 1.442695
        %v569 = vpow.pop %v568
        %v570 = vsub.f32 %v569, 1.0
        %v571 = vsel %vm566, %v563, %v570
        %v572 = vld [vmem:[#allocation11] sm:$0x1]
        %v574 = vlaneseq
        %v575 = vshrl.u32 %v574, 7
        %v576 = vsub.s32 0, %v575
        %v577 = vrot.slane %v572, %v576
        %v579 = vmul.f32 %v571, %v577
        %v580 = vld [vmem:[#allocation13] sm:$0x1]
        %v582 = vlaneseq
        %v583 = vshrl.u32 %v582, 7
        %v584 = vsub.s32 0, %v583
        %v585 = vrot.slane %v580, %v584
        %v587 = vadd.f32 %v579, %v585
        %588 = vst [vmem:[%s372] sm:$0xff] %v587
        %s589 = sand.u32 %s187, 1
        %s590 = scalar_lea.sflag [#allocation4], %s589
        %s591 = sand.u32 %s187, 1
        %s592 = smul.addr %s591, 8
        %s593 = scalar_lea.vmem [#allocation14], %s592
        // Predicated region
        $region77: #{tpu_custom_call.1} parent=47 // pred_check
          %p594 = pneg %p197
        $region78: #{tpu_custom_call.1} parent=47 // pred_check_branch
          %596 = sbr.rel (%p594) target = $region80
        $region79: #{tpu_custom_call.1} parent=47 // pred_region
          %s598 = ssub.s32 128, 128
          %599 = vsyncadd %s590, %s598
          %s600 = smul.addr %s27, 128
          %s601 = scalar_lea.hbm %s7, %s600
          %s603 = sshll.u32 %s593, 4
          %s604 = int_to_ptr.vmem [resolvable:$true] %s603
          %606 = dma.vmem_to_hbm [thread:$0]  %s604, 128, %s601, %s590
        $region80: #{tpu_custom_call.1} parent=47 // pred_fallthru
          _
      $region48: #{tpu_custom_call.1} parent=5 // pred_fallthru
        _
      %p607 = scmp.le.s32.totalorder 2, %s22
      // Predicated region
      $region81: #{tpu_custom_call.1} parent=5 // pred_check
        %p608 = pneg %p607
      $region82: #{tpu_custom_call.1} parent=5 // pred_check_branch
        %610 = sbr.rel (%p608) target = $region84
      $region83: #{tpu_custom_call.1} parent=5 // pred_region
        %s611 = ssub.s32 %s22, 2
        // Predicated region
        $region85: #{tpu_custom_call.1} parent=83 // pred_check
          %p612 = pneg %p203
        $region86: #{tpu_custom_call.1} parent=83 // pred_check_branch
          %614 = sbr.rel (%p612) target = $region88
        $region87: #{tpu_custom_call.1} parent=83 // pred_region
          %s615 = sand.u32 %s188, 1
          %s616 = scalar_lea.sflag [#allocation4], %s615
          %s617 = sand.u32 %s188, 1
          %s618 = smul.addr %s617, 8
          %s619 = scalar_lea.vmem [#allocation14], %s618
          %620 = dma.done %s616, 128
        $region88: #{tpu_custom_call.1} parent=83 // pred_fallthru
          _
      $region84: #{tpu_custom_call.1} parent=5 // pred_fallthru
        _
    $region6: #{tpu_custom_call.1} parent=1 // loop_footer
      %s26 = sadd.s32 1, %s22
    $region7: #{tpu_custom_call.1} parent=1 // loop_footer_branch
      %21 = sbr.rel target = $region3
    $region8: #{tpu_custom_call.1} parent=1 // loop_exit
      _
    %621 = vsyncpa [#allocation3], 1
    %s622 = scalar_lea.sflag [#allocation3], 1
    %623 = vsyncpa %s622, 1
    %624 = vsyncpa [#allocation6], 1
    %625 = vsyncpa [#allocation9], 1
    %626 = vsyncpa [#allocation12], 1
    %627 = vsyncpa [#allocation4], 1
    %s628 = scalar_lea.sflag [#allocation4], 1
    %629 = vsyncpa %s628, 1

</llo_original>
